<compile_context>
chip_gen: v6e
topology: v6e:2x2x1
jax: 0.10.0
libtpu: 0.0.40
codegen_flags: <defaults>
</compile_context>

<pallas_src>
import jax
import jax.numpy as jnp
from jax import lax
from jax.experimental import pallas as pl
from jax.experimental.pallas import tpu as pltpu


def _round_up(x, m):
    return ((x + m - 1) // m) * m


def _pick_m_tile(M):
    """Row tile for the projection: avoid near-2x padding, keep tiles multiple of 8."""
    Mp = _round_up(M, 8)
    if Mp <= 512:
        return Mp, Mp
    for cand in (512, 256, 128):
        if Mp % cand == 0:
            return cand, Mp
    Mp = _round_up(Mp, 128)
    return 128, Mp


def _vmem_limit_bytes():
    """Per-generation VMEM limit: ~48 MiB on v5e/v6e (128 MiB), ~38 MiB on v7x (64 MiB)."""
    cap = 128 * 1024 * 1024
    try:
        info = pltpu.get_tpu_info()
        cap = int(getattr(info, "vmem_capacity_bytes", cap))
    except Exception:
        pass
    return min(48 * 1024 * 1024, int(cap * 0.6))


# --------------------------------------------------------------------------------------
# Kernel 1: LSTM recurrence over one time chunk (input gate matmul hoisted per chunk).
# --------------------------------------------------------------------------------------
def lstm_chunk_kernel(x_ref, wih_ref, whh_ref, b_ref, h_out_ref, gx_ref, h_sc, c_sc):
    """One time chunk of the LSTM recurrence.

    x_ref:     (Tc, Bb, Ep)  inputs for this chunk (compute dtype)
    wih_ref:   (Ep, 4*Hp)    pre-transposed input weights (gate order i|f|g|o, lane-aligned)
    whh_ref:   (Hp, 4*Hp)    pre-transposed recurrent weights
    b_ref:     (1, 4*Hp)     combined bias (b_ih + b_hh), f32
    h_out_ref: (Tc, Bb, Hp)  hidden state per timestep, f32
    gx_ref:    VMEM (Tc, Bb, 4*Hp) f32 scratch: hoisted X @ W_ih + b for the chunk
    h_sc,c_sc: VMEM (Bb, Hp) f32 scratch: recurrent carry across time chunks
    """
    Tc, Bb, Ep = x_ref.shape
    Hp = whh_ref.shape[0]

    # New batch block -> reset the carry (time-chunk axis is program_id(1)).
    @pl.when(pl.program_id(1) == 0)
    def _():
        h_sc[...] = jnp.zeros_like(h_sc)
        c_sc[...] = jnp.zeros_like(c_sc)

    # Hoisted input-side gate matmul: one well-shaped (Tc*Bb, Ep) x (Ep, 4Hp) MXU matmul
    # for the whole chunk, instead of Tc tiny (Bb, Ep) matmuls on the serial critical path.
    # Bb is a multiple of the sublane packing, so these reshapes are layout-preserving.
    x_flat = x_ref[...].reshape(Tc * Bb, Ep)
    gx = jnp.dot(x_flat, wih_ref[...], preferred_element_type=jnp.float32) + b_ref[...]
    gx_ref[...] = gx.reshape(Tc, Bb, 4 * Hp)

    w_hh = whh_ref[...]  # resident for the whole chunk

    def sig(v):
        # sigmoid(x) = 0.5*tanh(0.5*x) + 0.5 -> single EUP op per element.
        return 0.5 * jnp.tanh(0.5 * v) + 0.5

    def step(t, carry):
        h, c = carry  # f32 (Bb, Hp)
        gates = gx_ref[t] + jnp.dot(
            h.astype(w_hh.dtype), w_hh, preferred_element_type=jnp.float32
        )  # (Bb, 4*Hp) f32; Hp is a multiple of 128 -> every gate slice is lane-aligned
        i_g = sig(gates[:, 0 * Hp:1 * Hp])
        f_g = sig(gates[:, 1 * Hp:2 * Hp])
        g_g = jnp.tanh(gates[:, 2 * Hp:3 * Hp])
        o_g = sig(gates[:, 3 * Hp:4 * Hp])
        c_new = f_g * c + i_g * g_g
        h_new = o_g * jnp.tanh(c_new)
        h_out_ref[t] = h_new.astype(h_out_ref.dtype)
        return (h_new, c_new)

    h_last, c_last = lax.fori_loop(0, Tc, step, (h_sc[...], c_sc[...]))
    h_sc[...] = h_last
    c_sc[...] = c_last


# --------------------------------------------------------------------------------------
# Kernel 2: generic tiled matmul + bias (used for the vocab projection).
# --------------------------------------------------------------------------------------
def matmul_bias_kernel(x_ref, w_ref, b_ref, o_ref):
    """One (tile_m, K) x (K, tile_n) tile: o = x @ w + b (f32 accumulation)."""
    o_ref[...] = (
        jnp.dot(x_ref[...].astype(w_ref.dtype), w_ref[...],
                preferred_element_type=jnp.float32)
        + b_ref[...]
    ).astype(o_ref.dtype)


# --------------------------------------------------------------------------------------
# One-time parameter preparation (hoisted out of the forward pass).
# --------------------------------------------------------------------------------------
def prepare_decoder_params(params, compute_dtype=jnp.float32):
    """Pre-transpose / pad all weights once.

    compute_dtype: dtype of matmul operands.  bfloat16 is recommended on v5e, v6e and
    v7x alike (halves resident weight VMEM + operand HBM traffic, doubles effective MXU
    throughput); gate math, accumulation and the recurrent state always remain float32.
    """
    emb_w = params["embedding"]             # (V, E)
    w_ih = params["w_ih"]                   # (4H, E), gate order i, f, g, o
    w_hh = params["w_hh"]                   # (4H, H)
    bias = params["b_ih"] + params["b_hh"]  # (4H,)
    w_out = params["w_out"]                 # (V, H)
    b_out = params["b_out"]                 # (V,)

    V, E = emb_w.shape
    H = w_hh.shape[1]

    Ep = _round_up(E, 128)
    Hp = _round_up(H, 128)
    Vp0 = _round_up(V, 128)
    if Vp0 <= 512:
        tile_v, Vp = Vp0, Vp0
    else:
        # Pad the vocab up to a multiple of 512 so the projection always uses a 512-lane
        # tile (fewer grid steps, wider unmasked stores, bigger W_out DMA blocks).
        tile_v, Vp = 512, _round_up(V, 512)

    def pack_gate_weights(w, in_dim, in_pad):
        # (4H, in_dim) -> (in_pad, 4*Hp): transposed once here so the kernels never
        # transpose, and each gate block starts at a lane-aligned column.
        w4 = w.reshape(4, H, in_dim).astype(compute_dtype)
        out = jnp.zeros((in_pad, 4 * Hp), compute_dtype)
        for g in range(4):
            out = out.at[:in_dim, g * Hp:g * Hp + H].set(w4[g].T)
        return out

    wih_p = pack_gate_weights(w_ih, E, Ep)                          # (Ep, 4*Hp)
    whh_p = pack_gate_weights(w_hh, H, Hp)                          # (Hp, 4*Hp)
    b4 = bias.reshape(4, H).astype(jnp.float32)
    bias_p = jnp.zeros((1, 4 * Hp), jnp.float32)
    for g in range(4):
        bias_p = bias_p.at[0, g * Hp:g * Hp + H].set(b4[g])

    w_out_p = jnp.zeros((Hp, Vp), compute_dtype).at[:H, :V].set(
        w_out.T.astype(compute_dtype))
    b_out_p = jnp.zeros((1, Vp), jnp.float32).at[0, :V].set(b_out.astype(jnp.float32))

    return {
        "embedding": emb_w.astype(compute_dtype),
        "wih": wih_p, "whh": whh_p, "bias": bias_p,
        "w_out": w_out_p, "b_out": b_out_p,
        "E": E, "H": H, "V": V, "Ep": Ep, "Hp": Hp, "Vp": Vp, "tile_v": tile_v,
        "compute_dtype": compute_dtype,
    }


# --------------------------------------------------------------------------------------
# Forward pass.
# --------------------------------------------------------------------------------------
def decoder_rnn_forward(prepped, features, captions):
    """Pallas implementation of DecoderRNN.forward.

    features: (B, E) float32
    captions: (B, T) int32
    returns:  (B, T, V) float32 logits
    """
    cd = prepped["compute_dtype"]
    E, H, V = prepped["E"], prepped["H"], prepped["V"]
    Ep, Hp, Vp, tile_v = prepped["Ep"], prepped["Hp"], prepped["Vp"], prepped["tile_v"]

    B = features.shape[0]
    T = captions.shape[1]

    # With sub-32-bit operands, pad the batch to the 16-row packed sublane tile.
    min_sub = 16 if jnp.dtype(cd).itemsize < 4 else 8
    Bp = _round_up(B, min_sub)

    # ---- glue (XLA): embedding lookup + sequence assembly ---------------------------
    # PyTorch drops the last LSTM output (hiddens[:, :-1, :]), so only the first T
    # inputs are needed: [features, emb(captions[:, :T-1])], time-major.
    # TODO(synk): for large E*T, gather embedding rows inside the kernel instead
    # (scalar-prefetched caption ids + DMA gather) to avoid this HBM round trip.
    emb = jnp.take(prepped["embedding"], captions[:, : T - 1], axis=0)   # (B, T-1, E)
    seq = jnp.concatenate([features[:, None, :].astype(cd), emb], axis=1)  # (B, T, E)
    seq = jnp.transpose(seq, (1, 0, 2))                                  # (T, B, E)

    # Time-chunked recurrence: bounds resident VMEM (v7x-friendly) and overlaps the
    # seq DMA-in / h DMA-out of chunk i±1 with the recurrence of chunk i.
    Tc = T if T <= 32 else 32
    Tp = _round_up(T, Tc)
    seq_p = jnp.zeros((Tp, Bp, Ep), cd).at[:T, :B, :E].set(seq)

    # Optional batch split (second TensorCore on v7x); batch rows are independent.
    n_b = 2 if (Bp // 2) % min_sub == 0 and Bp >= 2 * min_sub else 1
    Bb = Bp // n_b
    n_t = Tp // Tc

    vmem_limit = _vmem_limit_bytes()

    # ---- kernel 1: chunked LSTM recurrence ------------------------------------------
    # TODO(synk): mark the grid-invariant weight BlockSpecs pipeline_mode=pl.Buffered(1)
    # to drop their second VMEM buffer once very large H/E weights are needed on v7x.
    hiddens = pl.pallas_call(
        lstm_chunk_kernel,
        out_shape=jax.ShapeDtypeStruct((Tp, Bp, Hp), jnp.float32),
        grid_spec=pltpu.PrefetchScalarGridSpec(
            num_scalar_prefetch=0,
            grid=(n_b, n_t),
            in_specs=[
                pl.BlockSpec((Tc, Bb, Ep), lambda b, t: (t, b, 0)),    # seq chunk
                pl.BlockSpec((Ep, 4 * Hp), lambda b, t: (0, 0)),       # W_ih (pre-T)
                pl.BlockSpec((Hp, 4 * Hp), lambda b, t: (0, 0)),       # W_hh (pre-T)
                pl.BlockSpec((1, 4 * Hp), lambda b, t: (0, 0)),        # bias
            ],
            out_specs=pl.BlockSpec((Tc, Bb, Hp), lambda b, t: (t, b, 0)),
            scratch_shapes=[
                pltpu.VMEM((Tc, Bb, 4 * Hp), jnp.float32),             # hoisted X@W_ih
                pltpu.VMEM((Bb, Hp), jnp.float32),                     # h carry
                pltpu.VMEM((Bb, Hp), jnp.float32),                     # c carry
            ],
        ),
        compiler_params=pltpu.CompilerParams(
            dimension_semantics=("parallel", "arbitrary"),  # batch split / serial time
            vmem_limit_bytes=vmem_limit,
        ),
    )(seq_p, prepped["wih"], prepped["whh"], prepped["bias"])

    # ---- batch-major hiddens (small: T*B*H) so the projection output needs no final
    #      transpose of the much larger T*B*V logits tensor -----------------------------
    h_bm = jnp.transpose(hiddens[:T], (1, 0, 2)).reshape(Bp * T, Hp)     # (Bp*T, Hp) f32
    M = Bp * T
    tile_m, Mp = _pick_m_tile(M)
    if Mp != M:
        h_bm = jnp.zeros((Mp, Hp), jnp.float32).at[:M].set(h_bm)

    # ---- kernel 2: vocab projection as one big tiled matmul ---------------------------
    logits_p = pl.pallas_call(
        matmul_bias_kernel,
        out_shape=jax.ShapeDtypeStruct((Mp, Vp), jnp.float32),
        grid_spec=pltpu.PrefetchScalarGridSpec(
            num_scalar_prefetch=0,
            grid=(Mp // tile_m, Vp // tile_v),
            in_specs=[
                pl.BlockSpec((tile_m, Hp), lambda m, v: (m, 0)),       # hidden rows (f32)
                pl.BlockSpec((Hp, tile_v), lambda m, v: (0, v)),       # W_out (pre-T)
                pl.BlockSpec((1, tile_v), lambda m, v: (0, v)),        # b_out
            ],
            out_specs=pl.BlockSpec((tile_m, tile_v), lambda m, v: (m, v)),
        ),
        compiler_params=pltpu.CompilerParams(
            dimension_semantics=("parallel", "parallel"),              # megacore-shardable
            vmem_limit_bytes=vmem_limit,
        ),
    )(h_bm, prepped["w_out"], prepped["b_out"])

    # Rows are already batch-major: row = b*T + t  ->  no logits transpose.
    logits = logits_p[:M].reshape(Bp, T, Vp)[:B, :, :V]
    return logits


# --------------------------------------------------------------------------------------
# Pure-JAX reference (mirrors PyTorch semantics) + synthetic init.
# --------------------------------------------------------------------------------------
def reference_forward(params, features, captions):
    emb_w = params["embedding"]
    w_ih, w_hh = params["w_ih"], params["w_hh"]
    b = params["b_ih"] + params["b_hh"]
    w_out, b_out = params["w_out"], params["b_out"]
    H = w_hh.shape[1]

    emb = jnp.take(emb_w, captions, axis=0)
    seq = jnp.concatenate([features[:, None, :], emb], axis=1)     # (B, T+1, E)
    B = seq.shape[0]

    def step(carry, x_t):
        h, c = carry
        gates = x_t @ w_ih.T + h @ w_hh.T + b
        i = jax.nn.sigmoid(gates[:, 0 * H:1 * H])
        f = jax.nn.sigmoid(gates[:, 1 * H:2 * H])
        g = jnp.tanh(gates[:, 2 * H:3 * H])
        o = jax.nn.sigmoid(gates[:, 3 * H:4 * H])
        c = f * c + i * g
        h = o * jnp.tanh(c)
        return (h, c), h

    h0 = jnp.zeros((B, H), jnp.float32)
    c0 = jnp.zeros((B, H), jnp.float32)
    _, hs = lax.scan(step, (h0, c0), jnp.transpose(seq, (1, 0, 2)))
    hs = jnp.transpose(hs, (1, 0, 2))[:, :-1, :]                   # drop last timestep
    return hs @ w_out.T + b_out


def init_params(key, embed_size, hidden_size, vocab_size):
    ks = jax.random.split(key, 7)
    u = lambda k, shape, s: jax.random.uniform(k, shape, jnp.float32, -s, s)
    lstm_scale = 1.0 / jnp.sqrt(hidden_size)
    return {
        "embedding": u(ks[0], (vocab_size, embed_size), 0.1),      # uniform_(-0.1, 0.1)
        "w_ih": u(ks[1], (4 * hidden_size, embed_size), lstm_scale),
        "w_hh": u(ks[2], (4 * hidden_size, hidden_size), lstm_scale),
        "b_ih": u(ks[3], (4 * hidden_size,), lstm_scale),
        "b_hh": u(ks[4], (4 * hidden_size,), lstm_scale),
        "w_out": u(ks[5], (vocab_size, hidden_size), 0.1),         # uniform_(-0.1, 0.1)
        "b_out": jnp.zeros((vocab_size,), jnp.float32),            # fill_(0)
    }


if __name__ == "__main__":
    B, T = 2, 8            # batch, caption length
    E, H, V = 32, 32, 64   # embed_size, hidden_size, vocab_size

    key = jax.random.PRNGKey(0)
    k_p, k_f, k_c = jax.random.split(key, 3)
    params = init_params(k_p, E, H, V)
    features = jax.random.normal(k_f, (B, E), jnp.float32)
    captions = jax.random.randint(k_c, (B, T), 0, V, jnp.int32)

    ref = reference_forward(params, features, captions)

    # f32 operand path: must match the reference tightly.
    prepped_f32 = prepare_decoder_params(params, compute_dtype=jnp.float32)
    out = jax.block_until_ready(decoder_rnn_forward(prepped_f32, features, captions))
    assert out.shape == (B, T, V)
    assert jnp.allclose(out, ref, atol=1e-4, rtol=1e-4)

    # bf16 matmul-operand path (recommended on v5e/v6e/v7x): f32 accumulation and f32
    # hidden states, loose tolerance for the bf16 operands.
    prepped_bf16 = prepare_decoder_params(params, compute_dtype=jnp.bfloat16)
    out_bf16 = jax.block_until_ready(decoder_rnn_forward(prepped_bf16, features, captions))
    assert out_bf16.shape == (B, T, V)
    assert jnp.allclose(out_bf16, ref, atol=1e-1, rtol=1e-1)

    print("KERNEL_OK")
</pallas_src>

<mosaic_0001>
module attributes {stable_mosaic.version = 11 : i64} {
  func.func @lstm_chunk_kernel(%arg0: i32, %arg1: i32, %arg2: memref<8x8x128xf32, #tpu.memory_space<vmem>>, %arg3: memref<128x512xf32, #tpu.memory_space<vmem>>, %arg4: memref<128x512xf32, #tpu.memory_space<vmem>>, %arg5: memref<1x512xf32, #tpu.memory_space<vmem>>, %arg6: memref<8x8x128xf32, #tpu.memory_space<vmem>>, %arg7: memref<8x8x512xf32, #tpu.memory_space<vmem>>, %arg8: memref<8x128xf32, #tpu.memory_space<vmem>>, %arg9: memref<8x128xf32, #tpu.memory_space<vmem>>) attributes {dimension_semantics = [#tpu.dimension_semantics<parallel>, #tpu.dimension_semantics<arbitrary>], iteration_bounds = array<i64: 1, 1>, scalar_prefetch = 0 : i64, scratch_operands = 3 : i64, tpu.core_type = #tpu.core_type<tc>, window_params = [{transform_indices = @transform_0, window_bounds = array<i64: 8, 8, 128>}, {pipeline_mode = #tpu.pipeline_mode<synchronous>, transform_indices = @transform_1, window_bounds = array<i64: 128, 512>}, {pipeline_mode = #tpu.pipeline_mode<synchronous>, transform_indices = @transform_2, window_bounds = array<i64: 128, 512>}, {pipeline_mode = #tpu.pipeline_mode<synchronous>, transform_indices = @transform_3, window_bounds = array<i64: 1, 512>}, {transform_indices = @transform_4, window_bounds = array<i64: 8, 8, 128>}]} {
    %c0_i32 = arith.constant 0 : i32
    %0 = arith.cmpi eq, %arg1, %c0_i32 : i32
    %1 = arith.extui %0 : i1 to i32
    %c0_i32_0 = arith.constant 0 : i32
    %2 = arith.cmpi ne, %1, %c0_i32_0 : i32
    scf.if %2 {
      %cst_22 = arith.constant 0.000000e+00 : f32
      %19 = vector.broadcast %cst_22 : f32 to vector<8x128xf32>
      %c0_23 = arith.constant 0 : index
      %c0_24 = arith.constant 0 : index
      %20 = vector.load %arg8[%c0_23, %c0_24] : memref<8x128xf32, #tpu.memory_space<vmem>>, vector<8x128xf32>
      tpu.vector_store %arg8[%c0_23, %c0_24], %19 {strides = array<i32>} : memref<8x128xf32, #tpu.memory_space<vmem>>, vector<8x128xf32>,
      %cst_25 = arith.constant 0.000000e+00 : f32
      %21 = vector.broadcast %cst_25 : f32 to vector<8x128xf32>
      %c0_26 = arith.constant 0 : index
      %c0_27 = arith.constant 0 : index
      %22 = vector.load %arg9[%c0_26, %c0_27] : memref<8x128xf32, #tpu.memory_space<vmem>>, vector<8x128xf32>
      tpu.vector_store %arg9[%c0_26, %c0_27], %21 {strides = array<i32>} : memref<8x128xf32, #tpu.memory_space<vmem>>, vector<8x128xf32>,
    } else {
    }
    %c0 = arith.constant 0 : index
    %c0_1 = arith.constant 0 : index
    %c0_2 = arith.constant 0 : index
    %3 = vector.load %arg2[%c0, %c0_1, %c0_2] : memref<8x8x128xf32, #tpu.memory_space<vmem>>, vector<8x8x128xf32>
    %4 = vector.shape_cast %3 : vector<8x8x128xf32> to vector<64x128xf32>
    %c0_3 = arith.constant 0 : index
    %c0_4 = arith.constant 0 : index
    %5 = vector.load %arg3[%c0_3, %c0_4] : memref<128x512xf32, #tpu.memory_space<vmem>>, vector<128x512xf32>
    %cst = arith.constant dense<0.000000e+00> : vector<64x512xf32>
    %6 = tpu.matmul %4, %5, %cst {dimension_numbers = #tpu.dot_dimension_numbers<[1], [0], [0], [1], [0, 0, 1, 1], [], []>} : vector<64x128xf32>, vector<128x512xf32>, vector<64x512xf32> -> vector<64x512xf32>
    %c0_5 = arith.constant 0 : index
    %c0_6 = arith.constant 0 : index
    %7 = vector.load %arg5[%c0_5, %c0_6] : memref<1x512xf32, #tpu.memory_space<vmem>>, vector<1x512xf32>
    %8 = vector.broadcast %7 : vector<1x512xf32> to vector<64x512xf32>
    %9 = arith.addf %6, %8 : vector<64x512xf32>
    %10 = vector.shape_cast %9 : vector<64x512xf32> to vector<8x8x512xf32>
    %c0_7 = arith.constant 0 : index
    %c0_8 = arith.constant 0 : index
    %c0_9 = arith.constant 0 : index
    %11 = vector.load %arg7[%c0_7, %c0_8, %c0_9] : memref<8x8x512xf32, #tpu.memory_space<vmem>>, vector<8x8x512xf32>
    tpu.vector_store %arg7[%c0_7, %c0_8, %c0_9], %10 {strides = array<i32>} : memref<8x8x512xf32, #tpu.memory_space<vmem>>, vector<8x8x512xf32>,
    %c0_10 = arith.constant 0 : index
    %c0_11 = arith.constant 0 : index
    %12 = vector.load %arg4[%c0_10, %c0_11] : memref<128x512xf32, #tpu.memory_space<vmem>>, vector<128x512xf32>
    %c0_12 = arith.constant 0 : index
    %c0_13 = arith.constant 0 : index
    %13 = vector.load %arg8[%c0_12, %c0_13] : memref<8x128xf32, #tpu.memory_space<vmem>>, vector<8x128xf32>
    %c0_14 = arith.constant 0 : index
    %c0_15 = arith.constant 0 : index
    %14 = vector.load %arg9[%c0_14, %c0_15] : memref<8x128xf32, #tpu.memory_space<vmem>>, vector<8x128xf32>
    %c0_i32_16 = arith.constant 0 : i32
    %c8_i32 = arith.constant 8 : i32
    %15 = arith.addi %c0_i32_16, %c8_i32 : i32
    %c1_i32 = arith.constant 1 : i32
    %16:2 = scf.for %arg10 = %c0_i32_16 to %15 step %c1_i32 iter_args(%arg11 = %13, %arg12 = %14) -> (vector<8x128xf32>, vector<8x128xf32>)  : i32 {
      %19 = arith.index_cast %arg10 : i32 to index
      %c0_22 = arith.constant 0 : index
      %c0_23 = arith.constant 0 : index
      %20 = vector.load %arg7[%19, %c0_22, %c0_23] : memref<8x8x512xf32, #tpu.memory_space<vmem>>, vector<1x8x512xf32>
      %21 = vector.shape_cast %20 : vector<1x8x512xf32> to vector<8x512xf32>
      %cst_24 = arith.constant dense<0.000000e+00> : vector<8x512xf32>
      %22 = tpu.matmul %arg11, %12, %cst_24 {dimension_numbers = #tpu.dot_dimension_numbers<[1], [0], [0], [1], [0, 0, 1, 1], [], []>} : vector<8x128xf32>, vector<128x512xf32>, vector<8x512xf32> -> vector<8x512xf32>
      %23 = arith.addf %21, %22 : vector<8x512xf32>
      %24 = vector.extract_strided_slice %23 {offsets = [0, 0], sizes = [8, 128], strides = [1, 1]} : vector<8x512xf32> to vector<8x128xf32>
      %cst_25 = arith.constant 5.000000e-01 : f32
      %25 = vector.broadcast %cst_25 : f32 to vector<8x128xf32>
      %26 = arith.mulf %25, %24 : vector<8x128xf32>
      %27 = math.tanh %26 : vector<8x128xf32>
      %cst_26 = arith.constant 5.000000e-01 : f32
      %28 = vector.broadcast %cst_26 : f32 to vector<8x128xf32>
      %29 = arith.mulf %28, %27 : vector<8x128xf32>
      %cst_27 = arith.constant 5.000000e-01 : f32
      %30 = vector.broadcast %cst_27 : f32 to vector<8x128xf32>
      %31 = arith.addf %29, %30 : vector<8x128xf32>
      %32 = vector.extract_strided_slice %23 {offsets = [0, 128], sizes = [8, 128], strides = [1, 1]} : vector<8x512xf32> to vector<8x128xf32>
      %cst_28 = arith.constant 5.000000e-01 : f32
      %33 = vector.broadcast %cst_28 : f32 to vector<8x128xf32>
      %34 = arith.mulf %33, %32 : vector<8x128xf32>
      %35 = math.tanh %34 : vector<8x128xf32>
      %cst_29 = arith.constant 5.000000e-01 : f32
      %36 = vector.broadcast %cst_29 : f32 to vector<8x128xf32>
      %37 = arith.mulf %36, %35 : vector<8x128xf32>
      %cst_30 = arith.constant 5.000000e-01 : f32
      %38 = vector.broadcast %cst_30 : f32 to vector<8x128xf32>
      %39 = arith.addf %37, %38 : vector<8x128xf32>
      %40 = vector.extract_strided_slice %23 {offsets = [0, 256], sizes = [8, 128], strides = [1, 1]} : vector<8x512xf32> to vector<8x128xf32>
      %41 = math.tanh %40 : vector<8x128xf32>
      %42 = vector.extract_strided_slice %23 {offsets = [0, 384], sizes = [8, 128], strides = [1, 1]} : vector<8x512xf32> to vector<8x128xf32>
      %cst_31 = arith.constant 5.000000e-01 : f32
      %43 = vector.broadcast %cst_31 : f32 to vector<8x128xf32>
      %44 = arith.mulf %43, %42 : vector<8x128xf32>
      %45 = math.tanh %44 : vector<8x128xf32>
      %cst_32 = arith.constant 5.000000e-01 : f32
      %46 = vector.broadcast %cst_32 : f32 to vector<8x128xf32>
      %47 = arith.mulf %46, %45 : vector<8x128xf32>
      %cst_33 = arith.constant 5.000000e-01 : f32
      %48 = vector.broadcast %cst_33 : f32 to vector<8x128xf32>
      %49 = arith.addf %47, %48 : vector<8x128xf32>
      %50 = arith.mulf %39, %arg12 : vector<8x128xf32>
      %51 = arith.mulf %31, %41 : vector<8x128xf32>
      %52 = arith.addf %50, %51 : vector<8x128xf32>
      %53 = math.tanh %52 : vector<8x128xf32>
      %54 = arith.mulf %49, %53 : vector<8x128xf32>
      %55 = arith.index_cast %arg10 : i32 to index
      %c0_34 = arith.constant 0 : index
      %c0_35 = arith.constant 0 : index
      %56 = vector.load %arg6[%55, %c0_34, %c0_35] : memref<8x8x128xf32, #tpu.memory_space<vmem>>, vector<1x8x128xf32>
      %57 = vector.shape_cast %56 : vector<1x8x128xf32> to vector<8x128xf32>
      %58 = vector.shape_cast %54 : vector<8x128xf32> to vector<1x8x128xf32>
      tpu.vector_store %arg6[%55, %c0_34, %c0_35], %58 {strides = array<i32>} : memref<8x8x128xf32, #tpu.memory_space<vmem>>, vector<1x8x128xf32>,
      scf.yield %54, %52 : vector<8x128xf32>, vector<8x128xf32>
    }
    %c8_i32_17 = arith.constant 8 : i32
    %c0_18 = arith.constant 0 : index
    %c0_19 = arith.constant 0 : index
    %17 = vector.load %arg8[%c0_18, %c0_19] : memref<8x128xf32, #tpu.memory_space<vmem>>, vector<8x128xf32>
    tpu.vector_store %arg8[%c0_18, %c0_19], %16#0 {strides = array<i32>} : memref<8x128xf32, #tpu.memory_space<vmem>>, vector<8x128xf32>,
    %c0_20 = arith.constant 0 : index
    %c0_21 = arith.constant 0 : index
    %18 = vector.load %arg9[%c0_20, %c0_21] : memref<8x128xf32, #tpu.memory_space<vmem>>, vector<8x128xf32>
    tpu.vector_store %arg9[%c0_20, %c0_21], %16#1 {strides = array<i32>} : memref<8x128xf32, #tpu.memory_space<vmem>>, vector<8x128xf32>,
    return
  }
  func.func @transform_0(%arg0: i32, %arg1: i32) -> (i32, i32, i32) {
    %c0_i32 = arith.constant 0 : i32
    %c0_i32_0 = arith.constant 0 : i32
    return %arg1, %arg0, %c0_i32 : i32, i32, i32
  }
  func.func @transform_1(%arg0: i32, %arg1: i32) -> (i32, i32) {
    %c0_i32 = arith.constant 0 : i32
    %c0_i32_0 = arith.constant 0 : i32
    %c0_i32_1 = arith.constant 0 : i32
    return %c0_i32, %c0_i32_0 : i32, i32
  }
  func.func @transform_2(%arg0: i32, %arg1: i32) -> (i32, i32) {
    %c0_i32 = arith.constant 0 : i32
    %c0_i32_0 = arith.constant 0 : i32
    %c0_i32_1 = arith.constant 0 : i32
    return %c0_i32, %c0_i32_0 : i32, i32
  }
  func.func @transform_3(%arg0: i32, %arg1: i32) -> (i32, i32) {
    %c0_i32 = arith.constant 0 : i32
    %c0_i32_0 = arith.constant 0 : i32
    %c0_i32_1 = arith.constant 0 : i32
    return %c0_i32, %c0_i32_0 : i32, i32
  }
  func.func @transform_4(%arg0: i32, %arg1: i32) -> (i32, i32, i32) {
    %c0_i32 = arith.constant 0 : i32
    %c0_i32_0 = arith.constant 0 : i32
    return %arg1, %arg0, %c0_i32 : i32, i32, i32
  }
}

</mosaic_0001>

<llo_original>
// kernel: tpu_custom_call.1
$region0: #{tpu_custom_call.1}
  #allocation0 [shape = 'u32[]', space=smem, size = 0x4, offset = 0x4, fixed_abs, tag = 'smem constant byte address 0x4 - core index']
  #allocation1 [shape = 'u32[144,128]{1,0:T(1,128)}', space=vmem, size = 0x12000, scoped, tag = 'internal scratch']
  #allocation2 [shape = 'f32[8,8,512]{2,1,0:T(8,128)}', space=vmem, size = 0x20000, scoped, tag = 'scratch operand']
  #allocation3 [shape = 'f32[8,128]{1,0:T(8,128)}', space=vmem, size = 0x1000, scoped, tag = 'scratch operand']
  #allocation4 [shape = 'f32[8,128]{1,0:T(8,128)}', space=vmem, size = 0x1000, scoped, tag = 'scratch operand']
  %s0 = inlined_call_operand.hbm [shape: f32[8,8,128], index: 0, kind: input, shape index: {}]
  %s1 = inlined_call_operand.hbm [shape: f32[128,512], index: 1, kind: input, shape index: {}]
  %s2 = inlined_call_operand.hbm [shape: f32[128,512], index: 2, kind: input, shape index: {}]
  %s3 = inlined_call_operand.vmem [shape: f32[1,512], index: 3, kind: input, shape index: {}]
  %s4 = inlined_call_operand.hbm [shape: f32[8,8,128], index: 4, kind: output, shape index: {}]
  %s5 = sld [smem:[#allocation0]]
  $region49: #{tpu_custom_call.1} parent=0
    _
  %s7 = ssub.s32 1, %s5
  %s8 = scalar_select 0, %s7, %s5
  $region1: #{tpu_custom_call.1} parent=0
    #allocation5 [shape = 'u8[32768]{0}', space=vmem, size = 0x8000, scoped, tag = 'input window, operand 0, single buffered']
    #allocation6 [shape = 's32[1]{0}', space=sflag, size = 0x4, scoped, tag = 'scoped memory for tpu_custom_call.1']
    #allocation7 [shape = 's32[1]{0}', space=sflag, size = 0x4, scoped, tag = 'scoped memory for tpu_custom_call.1']
    #allocation8 [shape = 'u8[262144]{0}', space=vmem, size = 0x40000, scoped, tag = 'input window, operand 1, single buffered']
    #allocation9 [shape = 's32[1]{0}', space=sflag, size = 0x4, scoped, tag = 'scoped memory for tpu_custom_call.1']
    #allocation10 [shape = 'u8[262144]{0}', space=vmem, size = 0x40000, scoped, tag = 'input window, operand 2, single buffered']
    #allocation11 [shape = 'u8[32768]{0}', space=vmem, size = 0x8000, scoped, tag = 'output window, operand 0, single buffered']
    %9 = vsyncpa [#allocation6], 0
    %10 = vsyncpa [#allocation9], 0
    %11 = vsyncpa [#allocation7], 0
    // Predicated region
    $region2: #{tpu_custom_call.1} parent=1 // pred_check
      _
    $region3: #{tpu_custom_call.1} parent=1 // pred_check_branch
      %13 = sbr.rel (0) target = $region5
    $region4: #{tpu_custom_call.1} parent=1 // pred_region
      %s15 = ssub.s32 1024, 1024
      %16 = vsyncadd [#allocation6], %s15
      %s17 = sshll.u32 [#allocation5], 4
      %s18 = int_to_ptr.vmem [resolvable:$true] %s17
      %23 = dma.hbm_to_vmem [thread:$0]  %s0, 1024, %s18, [#allocation6], 128, 128, 8
    $region5: #{tpu_custom_call.1} parent=1 // pred_fallthru
      _
    // Predicated region
    $region6: #{tpu_custom_call.1} parent=1 // pred_check
      _
    $region7: #{tpu_custom_call.1} parent=1 // pred_check_branch
      %25 = sbr.rel (0) target = $region9
    $region8: #{tpu_custom_call.1} parent=1 // pred_region
      %s27 = ssub.s32 8192, 8192
      %28 = vsyncadd [#allocation9], %s27
      %s29 = sshll.u32 [#allocation8], 4
      %s30 = int_to_ptr.vmem [resolvable:$true] %s29
      %35 = dma.hbm_to_vmem [thread:$0]  %s1, 8192, %s30, [#allocation9], 512, 512, 32
    $region9: #{tpu_custom_call.1} parent=1 // pred_fallthru
      _
    // Predicated region
    $region10: #{tpu_custom_call.1} parent=1 // pred_check
      _
    $region11: #{tpu_custom_call.1} parent=1 // pred_check_branch
      %37 = sbr.rel (0) target = $region13
    $region12: #{tpu_custom_call.1} parent=1 // pred_region
      %s39 = ssub.s32 8192, 8192
      %40 = vsyncadd [#allocation9], %s39
      %s41 = sshll.u32 [#allocation10], 4
      %s42 = int_to_ptr.vmem [resolvable:$true] %s41
      %47 = dma.hbm_to_vmem [thread:$0]  %s2, 8192, %s42, [#allocation9], 512, 512, 32
    $region13: #{tpu_custom_call.1} parent=1 // pred_fallthru
      _
    // Predicated region
    $region14: #{tpu_custom_call.1} parent=1 // pred_check
      _
    $region15: #{tpu_custom_call.1} parent=1 // pred_check_branch
      %49 = sbr.rel (0) target = $region17
    $region16: #{tpu_custom_call.1} parent=1 // pred_region
      _
    $region17: #{tpu_custom_call.1} parent=1 // pred_fallthru
      _
    // Predicated region
    $region18: #{tpu_custom_call.1} parent=1 // pred_check
      _
    $region19: #{tpu_custom_call.1} parent=1 // pred_check_branch
      %51 = sbr.rel (0) target = $region21
    $region20: #{tpu_custom_call.1} parent=1 // pred_region
      %52 = dma.done [#allocation6], 1024
    $region21: #{tpu_custom_call.1} parent=1 // pred_fallthru
      _
    // Predicated region
    $region22: #{tpu_custom_call.1} parent=1 // pred_check
      _
    $region23: #{tpu_custom_call.1} parent=1 // pred_check_branch
      %54 = sbr.rel (0) target = $region25
    $region24: #{tpu_custom_call.1} parent=1 // pred_region
      %55 = dma.done [#allocation9], 8192
    $region25: #{tpu_custom_call.1} parent=1 // pred_fallthru
      _
    // Predicated region
    $region26: #{tpu_custom_call.1} parent=1 // pred_check
      _
    $region27: #{tpu_custom_call.1} parent=1 // pred_check_branch
      %57 = sbr.rel (0) target = $region29
    $region28: #{tpu_custom_call.1} parent=1 // pred_region
      %58 = dma.done [#allocation9], 8192
    $region29: #{tpu_custom_call.1} parent=1 // pred_fallthru
      _
    %p59 = scmp.eq.s32.totalorder 0, 0
    // Predicated region
    $region30: #{tpu_custom_call.1} parent=1 // pred_check
      %p60 = pneg %p59
    $region31: #{tpu_custom_call.1} parent=1 // pred_check_branch
      %62 = sbr.rel (%p60) target = $region33
    $region32: #{tpu_custom_call.1} parent=1 // pred_region
      %63 = vst [vmem:[#allocation3] sm:$0xff] 0.0
      %64 = vst [vmem:[#allocation4] sm:$0xff] 0.0
    $region33: #{tpu_custom_call.1} parent=1 // pred_fallthru
      _
    %v65 = vld [vmem:[#allocation5] sm:$0xff]
    %v66 = vld [vmem:[#allocation5 + $0x8] sm:$0xff]
    %v67 = vld [vmem:[#allocation5 + $0x10] sm:$0xff]
    %v68 = vld [vmem:[#allocation5 + $0x18] sm:$0xff]
    %v69 = vld [vmem:[#allocation5 + $0x20] sm:$0xff]
    %v70 = vld [vmem:[#allocation5 + $0x28] sm:$0xff]
    %v71 = vld [vmem:[#allocation5 + $0x30] sm:$0xff]
    %v72 = vld [vmem:[#allocation5 + $0x38] sm:$0xff]
    %v73 = vld [vmem:[#allocation8] sm:$0xff]
    %v74 = vld [vmem:[#allocation8 + $0x8] sm:$0xff]
    %v75 = vld [vmem:[#allocation8 + $0x10] sm:$0xff]
    %v76 = vld [vmem:[#allocation8 + $0x18] sm:$0xff]
    %v77 = vld [vmem:[#allocation8 + $0x20] sm:$0xff]
    %v78 = vld [vmem:[#allocation8 + $0x28] sm:$0xff]
    %v79 = vld [vmem:[#allocation8 + $0x30] sm:$0xff]
    %v80 = vld [vmem:[#allocation8 + $0x38] sm:$0xff]
    %v81 = vld [vmem:[#allocation8 + $0x40] sm:$0xff]
    %v82 = vld [vmem:[#allocation8 + $0x48] sm:$0xff]
    %v83 = vld [vmem:[#allocation8 + $0x50] sm:$0xff]
    %v84 = vld [vmem:[#allocation8 + $0x58] sm:$0xff]
    %v85 = vld [vmem:[#allocation8 + $0x60] sm:$0xff]
    %v86 = vld [vmem:[#allocation8 + $0x68] sm:$0xff]
    %v87 = vld [vmem:[#allocation8 + $0x70] sm:$0xff]
    %v88 = vld [vmem:[#allocation8 + $0x78] sm:$0xff]
    %v89 = vld [vmem:[#allocation8 + $0x80] sm:$0xff]
    %v90 = vld [vmem:[#allocation8 + $0x88] sm:$0xff]
    %v91 = vld [vmem:[#allocation8 + $0x90] sm:$0xff]
    %v92 = vld [vmem:[#allocation8 + $0x98] sm:$0xff]
    %v93 = vld [vmem:[#allocation8 + $0xa0] sm:$0xff]
    %v94 = vld [vmem:[#allocation8 + $0xa8] sm:$0xff]
    %v95 = vld [vmem:[#allocation8 + $0xb0] sm:$0xff]
    %v96 = vld [vmem:[#allocation8 + $0xb8] sm:$0xff]
    %v97 = vld [vmem:[#allocation8 + $0xc0] sm:$0xff]
    %v98 = vld [vmem:[#allocation8 + $0xc8] sm:$0xff]
    %v99 = vld [vmem:[#allocation8 + $0xd0] sm:$0xff]
    %v100 = vld [vmem:[#allocation8 + $0xd8] sm:$0xff]
    %v101 = vld [vmem:[#allocation8 + $0xe0] sm:$0xff]
    %v102 = vld [vmem:[#allocation8 + $0xe8] sm:$0xff]
    %v103 = vld [vmem:[#allocation8 + $0xf0] sm:$0xff]
    %v104 = vld [vmem:[#allocation8 + $0xf8] sm:$0xff]
    %v105 = vld [vmem:[#allocation8 + $0x100] sm:$0xff]
    %v106 = vld [vmem:[#allocation8 + $0x108] sm:$0xff]
    %v107 = vld [vmem:[#allocation8 + $0x110] sm:$0xff]
    %v108 = vld [vmem:[#allocation8 + $0x118] sm:$0xff]
    %v109 = vld [vmem:[#allocation8 + $0x120] sm:$0xff]
    %v110 = vld [vmem:[#allocation8 + $0x128] sm:$0xff]
    %v111 = vld [vmem:[#allocation8 + $0x130] sm:$0xff]
    %v112 = vld [vmem:[#allocation8 + $0x138] sm:$0xff]
    %v113 = vld [vmem:[#allocation8 + $0x140] sm:$0xff]
    %v114 = vld [vmem:[#allocation8 + $0x148] sm:$0xff]
    %v115 = vld [vmem:[#allocation8 + $0x150] sm:$0xff]
    %v116 = vld [vmem:[#allocation8 + $0x158] sm:$0xff]
    %v117 = vld [vmem:[#allocation8 + $0x160] sm:$0xff]
    %v118 = vld [vmem:[#allocation8 + $0x168] sm:$0xff]
    %v119 = vld [vmem:[#allocation8 + $0x170] sm:$0xff]
    %v120 = vld [vmem:[#allocation8 + $0x178] sm:$0xff]
    %v121 = vld [vmem:[#allocation8 + $0x180] sm:$0xff]
    %v122 = vld [vmem:[#allocation8 + $0x188] sm:$0xff]
    %v123 = vld [vmem:[#allocation8 + $0x190] sm:$0xff]
    %v124 = vld [vmem:[#allocation8 + $0x198] sm:$0xff]
    %v125 = vld [vmem:[#allocation8 + $0x1a0] sm:$0xff]
    %v126 = vld [vmem:[#allocation8 + $0x1a8] sm:$0xff]
    %v127 = vld [vmem:[#allocation8 + $0x1b0] sm:$0xff]
    %v128 = vld [vmem:[#allocation8 + $0x1b8] sm:$0xff]
    %v129 = vld [vmem:[#allocation8 + $0x1c0] sm:$0xff]
    %v130 = vld [vmem:[#allocation8 + $0x1c8] sm:$0xff]
    %v131 = vld [vmem:[#allocation8 + $0x1d0] sm:$0xff]
    %v132 = vld [vmem:[#allocation8 + $0x1d8] sm:$0xff]
    %v133 = vld [vmem:[#allocation8 + $0x1e0] sm:$0xff]
    %v134 = vld [vmem:[#allocation8 + $0x1e8] sm:$0xff]
    %v135 = vld [vmem:[#allocation8 + $0x1f0] sm:$0xff]
    %v136 = vld [vmem:[#allocation8 + $0x1f8] sm:$0xff]
    %v137 = vld [vmem:[%s3] sm:$0xf]
    %v139 = vlaneseq
    %v140 = vshrl.u32 %v139, 7
    %v141 = vsub.s32 0, %v140
    %v142 = vrot.slane %v137, %v141
    %v143 = vlaneseq
    %v144 = vshrl.u32 %v143, 7
    %v145 = vsub.s32 1, %v144
    %v146 = vrot.slane %v137, %v145
    %v147 = vlaneseq
    %v148 = vshrl.u32 %v147, 7
    %v149 = vsub.s32 2, %v148
    %v150 = vrot.slane %v137, %v149
    %v151 = vlaneseq
    %v152 = vshrl.u32 %v151, 7
    %v153 = vsub.s32 3, %v152
    %v154 = vrot.slane %v137, %v153
    %159 = vmatprep.subr.mxu0 %v134
    %160 = vmatpush1.msra.mxu0 %v133
    %161 = vmatprep.subr.mxu0 %v130
    %162 = vmatpush1.msra.mxu0 %v129
    %163 = vmatprep.subr.mxu0 %v126
    %164 = vmatpush1.msra.mxu0 %v125
    %165 = vmatprep.subr.mxu0 %v122
    %166 = vmatpush1.msra.mxu0 %v121
    %167 = vmatprep.subr.mxu0 %v118
    %168 = vmatpush1.msra.mxu0 %v117
    %169 = vmatprep.subr.mxu0 %v114
    %170 = vmatpush1.msra.mxu0 %v113
    %171 = vmatprep.subr.mxu0 %v110
    %172 = vmatpush1.msra.mxu0 %v109
    %173 = vmatprep.subr.mxu0 %v106
    %174 = vmatpush1.msra.mxu0 %v105
    %175 = vmatprep.subr.mxu0 %v102
    %176 = vmatpush1.msra.mxu0 %v101
    %177 = vmatprep.subr.mxu0 %v98
    %178 = vmatpush1.msra.mxu0 %v97
    %179 = vmatprep.subr.mxu0 %v94
    %180 = vmatpush1.msra.mxu0 %v93
    %181 = vmatprep.subr.mxu0 %v90
    %182 = vmatpush1.msra.mxu0 %v89
    %183 = vmatprep.subr.mxu0 %v86
    %184 = vmatpush1.msra.mxu0 %v85
    %185 = vmatprep.subr.mxu0 %v82
    %186 = vmatpush1.msra.mxu0 %v81
    %187 = vmatprep.subr.mxu0 %v78
    %188 = vmatpush1.msra.mxu0 %v77
    %189 = vmatprep.subr.mxu0 %v74
    %190 = vmatpush1.msra.mxu0 %v73
    %191 = vmatprep.subr.mxu0 0.0
    %192 = vmatpush2.msra.mxu0 0.0
    %193 = vmatprep.subr.mxu0 0.0
    %194 = vmatpush2.msra.mxu0 0.0
    %195 = vmatprep.subr.mxu0 0.0
    %196 = vmatpush2.msra.mxu0 0.0
    %197 = vmatprep.subr.mxu0 0.0
    %198 = vmatpush2.msra.mxu0 0.0
    %199 = vmatprep.subr.mxu0 0.0
    %200 = vmatpush2.msra.mxu0 0.0
    %201 = vmatprep.subr.mxu0 0.0
    %202 = vmatpush2.msra.mxu0 0.0
    %203 = vmatprep.subr.mxu0 0.0
    %204 = vmatpush2.msra.mxu0 0.0
    %205 = vmatprep.subr.mxu0 0.0
    %206 = vmatpush2.msra.mxu0 0.0
    %207 = vmatprep.subr.mxu0 0.0
    %208 = vmatpush2.msra.mxu0 0.0
    %209 = vmatprep.subr.mxu0 0.0
    %210 = vmatpush2.msra.mxu0 0.0
    %211 = vmatprep.subr.mxu0 0.0
    %212 = vmatpush2.msra.mxu0 0.0
    %213 = vmatprep.subr.mxu0 0.0
    %214 = vmatpush2.msra.mxu0 0.0
    %215 = vmatprep.subr.mxu0 0.0
    %216 = vmatpush2.msra.mxu0 0.0
    %217 = vmatprep.subr.mxu0 0.0
    %218 = vmatpush2.msra.mxu0 0.0
    %219 = vmatprep.subr.mxu0 0.0
    %220 = vmatpush2.msra.mxu0 0.0
    %221 = vmatprep.subr.mxu0 0.0
    %222 = vmatpush2.msra.mxu0 0.0
    %223 = vmatprep.mubr.f32.mxu0 0.0
    %224 = vmatmul.mubr.f32.gmra.mxu0 %v65
    %v225 = vpop.f32.mrf.mxu0
    %v226 = vadd.f32 %v142, %v225
    %v227 = vpop.f32.mrf.mxu0
    %v228 = vadd.f32 %v146, %v227
    %229 = vmatprep.mubr.f32.mxu0 0.0
    %230 = vmatmul.mubr.f32.gmra.mxu0 %v66
    %v231 = vpop.f32.mrf.mxu0
    %v232 = vadd.f32 %v142, %v231
    %v233 = vpop.f32.mrf.mxu0
    %v234 = vadd.f32 %v146, %v233
    %235 = vmatprep.mubr.f32.mxu0 0.0
    %236 = vmatmul.mubr.f32.gmra.mxu0 %v67
    %v237 = vpop.f32.mrf.mxu0
    %v238 = vadd.f32 %v142, %v237
    %v239 = vpop.f32.mrf.mxu0
    %v240 = vadd.f32 %v146, %v239
    %241 = vmatprep.mubr.f32.mxu0 0.0
    %242 = vmatmul.mubr.f32.gmra.mxu0 %v68
    %v243 = vpop.f32.mrf.mxu0
    %v244 = vadd.f32 %v142, %v243
    %v245 = vpop.f32.mrf.mxu0
    %v246 = vadd.f32 %v146, %v245
    %247 = vmatprep.mubr.f32.mxu0 0.0
    %248 = vmatmul.mubr.f32.gmra.mxu0 %v69
    %v249 = vpop.f32.mrf.mxu0
    %v250 = vadd.f32 %v142, %v249
    %v251 = vpop.f32.mrf.mxu0
    %v252 = vadd.f32 %v146, %v251
    %253 = vmatprep.mubr.f32.mxu0 0.0
    %254 = vmatmul.mubr.f32.gmra.mxu0 %v70
    %v255 = vpop.f32.mrf.mxu0
    %v256 = vadd.f32 %v142, %v255
    %v257 = vpop.f32.mrf.mxu0
    %v258 = vadd.f32 %v146, %v257
    %259 = vmatprep.mubr.f32.mxu0 0.0
    %260 = vmatmul.mubr.f32.gmra.mxu0 %v71
    %v261 = vpop.f32.mrf.mxu0
    %v262 = vadd.f32 %v142, %v261
    %v263 = vpop.f32.mrf.mxu0
    %v264 = vadd.f32 %v146, %v263
    %265 = vmatprep.mubr.f32.mxu0 0.0
    %266 = vmatmul.mubr.f32.gmra.mxu0 %v72
    %v267 = vpop.f32.mrf.mxu0
    %v268 = vadd.f32 %v142, %v267
    %v269 = vpop.f32.mrf.mxu0
    %v270 = vadd.f32 %v146, %v269
    %271 = vdwg.mxu0
    %272 = vmatprep.subr.mxu0 %v136
    %273 = vmatpush1.msra.mxu0 %v135
    %274 = vmatprep.subr.mxu0 %v132
    %275 = vmatpush1.msra.mxu0 %v131
    %276 = vmatprep.subr.mxu0 %v128
    %277 = vmatpush1.msra.mxu0 %v127
    %278 = vmatprep.subr.mxu0 %v124
    %279 = vmatpush1.msra.mxu0 %v123
    %280 = vmatprep.subr.mxu0 %v120
    %281 = vmatpush1.msra.mxu0 %v119
    %282 = vmatprep.subr.mxu0 %v116
    %283 = vmatpush1.msra.mxu0 %v115
    %284 = vmatprep.subr.mxu0 %v112
    %285 = vmatpush1.msra.mxu0 %v111
    %286 = vmatprep.subr.mxu0 %v108
    %287 = vmatpush1.msra.mxu0 %v107
    %288 = vmatprep.subr.mxu0 %v104
    %289 = vmatpush1.msra.mxu0 %v103
    %290 = vmatprep.subr.mxu0 %v100
    %291 = vmatpush1.msra.mxu0 %v99
    %292 = vmatprep.subr.mxu0 %v96
    %293 = vmatpush1.msra.mxu0 %v95
    %294 = vmatprep.subr.mxu0 %v92
    %295 = vmatpush1.msra.mxu0 %v91
    %296 = vmatprep.subr.mxu0 %v88
    %297 = vmatpush1.msra.mxu0 %v87
    %298 = vmatprep.subr.mxu0 %v84
    %299 = vmatpush1.msra.mxu0 %v83
    %300 = vmatprep.subr.mxu0 %v80
    %301 = vmatpush1.msra.mxu0 %v79
    %302 = vmatprep.subr.mxu0 %v76
    %303 = vmatpush1.msra.mxu0 %v75
    %304 = vmatprep.subr.mxu0 0.0
    %305 = vmatpush2.msra.mxu0 0.0
    %306 = vmatprep.subr.mxu0 0.0
    %307 = vmatpush2.msra.mxu0 0.0
    %308 = vmatprep.subr.mxu0 0.0
    %309 = vmatpush2.msra.mxu0 0.0
    %310 = vmatprep.subr.mxu0 0.0
    %311 = vmatpush2.msra.mxu0 0.0
    %312 = vmatprep.subr.mxu0 0.0
    %313 = vmatpush2.msra.mxu0 0.0
    %314 = vmatprep.subr.mxu0 0.0
    %315 = vmatpush2.msra.mxu0 0.0
    %316 = vmatprep.subr.mxu0 0.0
    %317 = vmatpush2.msra.mxu0 0.0
    %318 = vmatprep.subr.mxu0 0.0
    %319 = vmatpush2.msra.mxu0 0.0
    %320 = vmatprep.subr.mxu0 0.0
    %321 = vmatpush2.msra.mxu0 0.0
    %322 = vmatprep.subr.mxu0 0.0
    %323 = vmatpush2.msra.mxu0 0.0
    %324 = vmatprep.subr.mxu0 0.0
    %325 = vmatpush2.msra.mxu0 0.0
    %326 = vmatprep.subr.mxu0 0.0
    %327 = vmatpush2.msra.mxu0 0.0
    %328 = vmatprep.subr.mxu0 0.0
    %329 = vmatpush2.msra.mxu0 0.0
    %330 = vmatprep.subr.mxu0 0.0
    %331 = vmatpush2.msra.mxu0 0.0
    %332 = vmatprep.subr.mxu0 0.0
    %333 = vmatpush2.msra.mxu0 0.0
    %334 = vmatprep.subr.mxu0 0.0
    %335 = vmatpush2.msra.mxu0 0.0
    %336 = vmatprep.mubr.f32.mxu0 0.0
    %337 = vmatmul.mubr.f32.gmra.mxu0 %v65
    %v338 = vpop.f32.mrf.mxu0
    %v339 = vadd.f32 %v150, %v338
    %v340 = vpop.f32.mrf.mxu0
    %v341 = vadd.f32 %v154, %v340
    %342 = vmatprep.mubr.f32.mxu0 0.0
    %343 = vmatmul.mubr.f32.gmra.mxu0 %v66
    %v344 = vpop.f32.mrf.mxu0
    %v345 = vadd.f32 %v150, %v344
    %v346 = vpop.f32.mrf.mxu0
    %v347 = vadd.f32 %v154, %v346
    %348 = vmatprep.mubr.f32.mxu0 0.0
    %349 = vmatmul.mubr.f32.gmra.mxu0 %v67
    %v350 = vpop.f32.mrf.mxu0
    %v351 = vadd.f32 %v150, %v350
    %v352 = vpop.f32.mrf.mxu0
    %v353 = vadd.f32 %v154, %v352
    %354 = vmatprep.mubr.f32.mxu0 0.0
    %355 = vmatmul.mubr.f32.gmra.mxu0 %v68
    %v356 = vpop.f32.mrf.mxu0
    %v357 = vadd.f32 %v150, %v356
    %v358 = vpop.f32.mrf.mxu0
    %v359 = vadd.f32 %v154, %v358
    %360 = vmatprep.mubr.f32.mxu0 0.0
    %361 = vmatmul.mubr.f32.gmra.mxu0 %v69
    %v362 = vpop.f32.mrf.mxu0
    %v363 = vadd.f32 %v150, %v362
    %v364 = vpop.f32.mrf.mxu0
    %v365 = vadd.f32 %v154, %v364
    %366 = vmatprep.mubr.f32.mxu0 0.0
    %367 = vmatmul.mubr.f32.gmra.mxu0 %v70
    %v368 = vpop.f32.mrf.mxu0
    %v369 = vadd.f32 %v150, %v368
    %v370 = vpop.f32.mrf.mxu0
    %v371 = vadd.f32 %v154, %v370
    %372 = vmatprep.mubr.f32.mxu0 0.0
    %373 = vmatmul.mubr.f32.gmra.mxu0 %v71
    %v374 = vpop.f32.mrf.mxu0
    %v375 = vadd.f32 %v150, %v374
    %v376 = vpop.f32.mrf.mxu0
    %v377 = vadd.f32 %v154, %v376
    %378 = vmatprep.mubr.f32.mxu0 0.0
    %379 = vmatmul.mubr.f32.gmra.mxu0 %v72
    %v380 = vpop.f32.mrf.mxu0
    %v381 = vadd.f32 %v150, %v380
    %v382 = vpop.f32.mrf.mxu0
    %v383 = vadd.f32 %v154, %v382
    %384 = vdwg.mxu0
    %385 = vst [vmem:[#allocation2] sm:$0xff] %v226
    %386 = vst [vmem:[#allocation2 + $0x8] sm:$0xff] %v228
    %387 = vst [vmem:[#allocation2 + $0x10] sm:$0xff] %v339
    %388 = vst [vmem:[#allocation2 + $0x18] sm:$0xff] %v341
    %389 = vst [vmem:[#allocation2 + $0x20] sm:$0xff] %v232
    %390 = vst [vmem:[#allocation2 + $0x28] sm:$0xff] %v234
    %391 = vst [vmem:[#allocation2 + $0x30] sm:$0xff] %v345
    %392 = vst [vmem:[#allocation2 + $0x38] sm:$0xff] %v347
    %393 = vst [vmem:[#allocation2 + $0x40] sm:$0xff] %v238
    %394 = vst [vmem:[#allocation2 + $0x48] sm:$0xff] %v240
    %395 = vst [vmem:[#allocation2 + $0x50] sm:$0xff] %v351
    %396 = vst [vmem:[#allocation2 + $0x58] sm:$0xff] %v353
    %397 = vst [vmem:[#allocation2 + $0x60] sm:$0xff] %v244
    %398 = vst [vmem:[#allocation2 + $0x68] sm:$0xff] %v246
    %399 = vst [vmem:[#allocation2 + $0x70] sm:$0xff] %v357
    %400 = vst [vmem:[#allocation2 + $0x78] sm:$0xff] %v359
    %401 = vst [vmem:[#allocation2 + $0x80] sm:$0xff] %v250
    %402 = vst [vmem:[#allocation2 + $0x88] sm:$0xff] %v252
    %403 = vst [vmem:[#allocation2 + $0x90] sm:$0xff] %v363
    %404 = vst [vmem:[#allocation2 + $0x98] sm:$0xff] %v365
    %405 = vst [vmem:[#allocation2 + $0xa0] sm:$0xff] %v256
    %406 = vst [vmem:[#allocation2 + $0xa8] sm:$0xff] %v258
    %407 = vst [vmem:[#allocation2 + $0xb0] sm:$0xff] %v369
    %408 = vst [vmem:[#allocation2 + $0xb8] sm:$0xff] %v371
    %409 = vst [vmem:[#allocation2 + $0xc0] sm:$0xff] %v262
    %410 = vst [vmem:[#allocation2 + $0xc8] sm:$0xff] %v264
    %411 = vst [vmem:[#allocation2 + $0xd0] sm:$0xff] %v375
    %412 = vst [vmem:[#allocation2 + $0xd8] sm:$0xff] %v377
    %413 = vst [vmem:[#allocation2 + $0xe0] sm:$0xff] %v268
    %414 = vst [vmem:[#allocation2 + $0xe8] sm:$0xff] %v270
    %415 = vst [vmem:[#allocation2 + $0xf0] sm:$0xff] %v381
    %416 = vst [vmem:[#allocation2 + $0xf8] sm:$0xff] %v383
    %v417 = vld [vmem:[#allocation10] sm:$0xff]
    %v418 = vld [vmem:[#allocation10 + $0x8] sm:$0xff]
    %v419 = vld [vmem:[#allocation10 + $0x10] sm:$0xff]
    %v420 = vld [vmem:[#allocation10 + $0x18] sm:$0xff]
    %v421 = vld [vmem:[#allocation10 + $0x20] sm:$0xff]
    %v422 = vld [vmem:[#allocation10 + $0x28] sm:$0xff]
    %v423 = vld [vmem:[#allocation10 + $0x30] sm:$0xff]
    %v424 = vld [vmem:[#allocation10 + $0x38] sm:$0xff]
    %v425 = vld [vmem:[#allocation10 + $0x40] sm:$0xff]
    %v426 = vld [vmem:[#allocation10 + $0x48] sm:$0xff]
    %v427 = vld [vmem:[#allocation10 + $0x50] sm:$0xff]
    %v428 = vld [vmem:[#allocation10 + $0x58] sm:$0xff]
    %v429 = vld [vmem:[#allocation10 + $0x60] sm:$0xff]
    %v430 = vld [vmem:[#allocation10 + $0x68] sm:$0xff]
    %v431 = vld [vmem:[#allocation10 + $0x70] sm:$0xff]
    %v432 = vld [vmem:[#allocation10 + $0x78] sm:$0xff]
    %v433 = vld [vmem:[#allocation10 + $0x80] sm:$0xff]
    %v434 = vld [vmem:[#allocation10 + $0x88] sm:$0xff]
    %v435 = vld [vmem:[#allocation10 + $0x90] sm:$0xff]
    %v436 = vld [vmem:[#allocation10 + $0x98] sm:$0xff]
    %v437 = vld [vmem:[#allocation10 + $0xa0] sm:$0xff]
    %v438 = vld [vmem:[#allocation10 + $0xa8] sm:$0xff]
    %v439 = vld [vmem:[#allocation10 + $0xb0] sm:$0xff]
    %v440 = vld [vmem:[#allocation10 + $0xb8] sm:$0xff]
    %v441 = vld [vmem:[#allocation10 + $0xc0] sm:$0xff]
    %v442 = vld [vmem:[#allocation10 + $0xc8] sm:$0xff]
    %v443 = vld [vmem:[#allocation10 + $0xd0] sm:$0xff]
    %v444 = vld [vmem:[#allocation10 + $0xd8] sm:$0xff]
    %v445 = vld [vmem:[#allocation10 + $0xe0] sm:$0xff]
    %v446 = vld [vmem:[#allocation10 + $0xe8] sm:$0xff]
    %v447 = vld [vmem:[#allocation10 + $0xf0] sm:$0xff]
    %v448 = vld [vmem:[#allocation10 + $0xf8] sm:$0xff]
    %v449 = vld [vmem:[#allocation10 + $0x100] sm:$0xff]
    %v450 = vld [vmem:[#allocation10 + $0x108] sm:$0xff]
    %v451 = vld [vmem:[#allocation10 + $0x110] sm:$0xff]
    %v452 = vld [vmem:[#allocation10 + $0x118] sm:$0xff]
    %v453 = vld [vmem:[#allocation10 + $0x120] sm:$0xff]
    %v454 = vld [vmem:[#allocation10 + $0x128] sm:$0xff]
    %v455 = vld [vmem:[#allocation10 + $0x130] sm:$0xff]
    %v456 = vld [vmem:[#allocation10 + $0x138] sm:$0xff]
    %v457 = vld [vmem:[#allocation10 + $0x140] sm:$0xff]
    %v458 = vld [vmem:[#allocation10 + $0x148] sm:$0xff]
    %v459 = vld [vmem:[#allocation10 + $0x150] sm:$0xff]
    %v460 = vld [vmem:[#allocation10 + $0x158] sm:$0xff]
    %v461 = vld [vmem:[#allocation10 + $0x160] sm:$0xff]
    %v462 = vld [vmem:[#allocation10 + $0x168] sm:$0xff]
    %v463 = vld [vmem:[#allocation10 + $0x170] sm:$0xff]
    %v464 = vld [vmem:[#allocation10 + $0x178] sm:$0xff]
    %v465 = vld [vmem:[#allocation10 + $0x180] sm:$0xff]
    %v466 = vld [vmem:[#allocation10 + $0x188] sm:$0xff]
    %v467 = vld [vmem:[#allocation10 + $0x190] sm:$0xff]
    %v468 = vld [vmem:[#allocation10 + $0x198] sm:$0xff]
    %v469 = vld [vmem:[#allocation10 + $0x1a0] sm:$0xff]
    %v470 = vld [vmem:[#allocation10 + $0x1a8] sm:$0xff]
    %v471 = vld [vmem:[#allocation10 + $0x1b0] sm:$0xff]
    %v472 = vld [vmem:[#allocation10 + $0x1b8] sm:$0xff]
    %v473 = vld [vmem:[#allocation10 + $0x1c0] sm:$0xff]
    %v474 = vld [vmem:[#allocation10 + $0x1c8] sm:$0xff]
    %v475 = vld [vmem:[#allocation10 + $0x1d0] sm:$0xff]
    %v476 = vld [vmem:[#allocation10 + $0x1d8] sm:$0xff]
    %v477 = vld [vmem:[#allocation10 + $0x1e0] sm:$0xff]
    %v478 = vld [vmem:[#allocation10 + $0x1e8] sm:$0xff]
    %v479 = vld [vmem:[#allocation10 + $0x1f0] sm:$0xff]
    %v480 = vld [vmem:[#allocation10 + $0x1f8] sm:$0xff]
    %v481 = vld [vmem:[#allocation3] sm:$0xff]
    %v482 = vld [vmem:[#allocation4] sm:$0xff]
    loop: start=0, step=1, limit=8
    $region34: #{tpu_custom_call.1} parent=1 // loop_pre_header
      _
    $region35: #{tpu_custom_call.1} parent=1 // loop_header
      %s484 = sphi 0, %s488
      %p485 = scmp.ge.s32.totalorder %s484, 8
      %v489 = vphi %v481, %v661
      %v490 = vphi %v482, %v659
    $region36: #{tpu_custom_call.1} parent=1 // loop_header_branch
      %487 = sbr.rel (%p485) target = $region40
    $region37: #{tpu_custom_call.1} parent=1 // loop_body
      %s491 = smul.u32 %s484, 4
      %s492 = smul.addr %s491, 8
      %s493 = scalar_lea.vmem [#allocation2], %s492
      %v494 = vld [vmem:[%s493] sm:$0xff]
      %v495 = vld [vmem:[%s493 + $0x8] sm:$0xff]
      %v496 = vld [vmem:[%s493 + $0x10] sm:$0xff]
      %v497 = vld [vmem:[%s493 + $0x18] sm:$0xff]
      %498 = vmatprep.subr.mxu0 %v478
      %499 = vmatpush1.msra.mxu0 %v477
      %500 = vmatprep.subr.mxu0 %v474
      %501 = vmatpush1.msra.mxu0 %v473
      %502 = vmatprep.subr.mxu0 %v470
      %503 = vmatpush1.msra.mxu0 %v469
      %504 = vmatprep.subr.mxu0 %v466
      %505 = vmatpush1.msra.mxu0 %v465
      %506 = vmatprep.subr.mxu0 %v462
      %507 = vmatpush1.msra.mxu0 %v461
      %508 = vmatprep.subr.mxu0 %v458
      %509 = vmatpush1.msra.mxu0 %v457
      %510 = vmatprep.subr.mxu0 %v454
      %511 = vmatpush1.msra.mxu0 %v453
      %512 = vmatprep.subr.mxu0 %v450
      %513 = vmatpush1.msra.mxu0 %v449
      %514 = vmatprep.subr.mxu0 %v446
      %515 = vmatpush1.msra.mxu0 %v445
      %516 = vmatprep.subr.mxu0 %v442
      %517 = vmatpush1.msra.mxu0 %v441
      %518 = vmatprep.subr.mxu0 %v438
      %519 = vmatpush1.msra.mxu0 %v437
      %520 = vmatprep.subr.mxu0 %v434
      %521 = vmatpush1.msra.mxu0 %v433
      %522 = vmatprep.subr.mxu0 %v430
      %523 = vmatpush1.msra.mxu0 %v429
      %524 = vmatprep.subr.mxu0 %v426
      %525 = vmatpush1.msra.mxu0 %v425
      %526 = vmatprep.subr.mxu0 %v422
      %527 = vmatpush1.msra.mxu0 %v421
      %528 = vmatprep.subr.mxu0 %v418
      %529 = vmatpush1.msra.mxu0 %v417
      %530 = vmatprep.subr.mxu0 0.0
      %531 = vmatpush2.msra.mxu0 0.0
      %532 = vmatprep.subr.mxu0 0.0
      %533 = vmatpush2.msra.mxu0 0.0
      %534 = vmatprep.subr.mxu0 0.0
      %535 = vmatpush2.msra.mxu0 0.0
      %536 = vmatprep.subr.mxu0 0.0
      %537 = vmatpush2.msra.mxu0 0.0
      %538 = vmatprep.subr.mxu0 0.0
      %539 = vmatpush2.msra.mxu0 0.0
      %540 = vmatprep.subr.mxu0 0.0
      %541 = vmatpush2.msra.mxu0 0.0
      %542 = vmatprep.subr.mxu0 0.0
      %543 = vmatpush2.msra.mxu0 0.0
      %544 = vmatprep.subr.mxu0 0.0
      %545 = vmatpush2.msra.mxu0 0.0
      %546 = vmatprep.subr.mxu0 0.0
      %547 = vmatpush2.msra.mxu0 0.0
      %548 = vmatprep.subr.mxu0 0.0
      %549 = vmatpush2.msra.mxu0 0.0
      %550 = vmatprep.subr.mxu0 0.0
      %551 = vmatpush2.msra.mxu0 0.0
      %552 = vmatprep.subr.mxu0 0.0
      %553 = vmatpush2.msra.mxu0 0.0
      %554 = vmatprep.subr.mxu0 0.0
      %555 = vmatpush2.msra.mxu0 0.0
      %556 = vmatprep.subr.mxu0 0.0
      %557 = vmatpush2.msra.mxu0 0.0
      %558 = vmatprep.subr.mxu0 0.0
      %559 = vmatpush2.msra.mxu0 0.0
      %560 = vmatprep.subr.mxu0 0.0
      %561 = vmatpush2.msra.mxu0 0.0
      %562 = vmatprep.mubr.f32.mxu0 0.0
      %563 = vmatmul.mubr.f32.gmra.mxu0 %v489
      %v564 = vpop.f32.mrf.mxu0
      %v565 = vadd.f32 0.0, %v564
      %v566 = vpop.f32.mrf.mxu0
      %v567 = vadd.f32 0.0, %v566
      %568 = vdwg.mxu0
      %569 = vmatprep.subr.mxu0 %v480
      %570 = vmatpush1.msra.mxu0 %v479
      %571 = vmatprep.subr.mxu0 %v476
      %572 = vmatpush1.msra.mxu0 %v475
      %573 = vmatprep.subr.mxu0 %v472
      %574 = vmatpush1.msra.mxu0 %v471
      %575 = vmatprep.subr.mxu0 %v468
      %576 = vmatpush1.msra.mxu0 %v467
      %577 = vmatprep.subr.mxu0 %v464
      %578 = vmatpush1.msra.mxu0 %v463
      %579 = vmatprep.subr.mxu0 %v460
      %580 = vmatpush1.msra.mxu0 %v459
      %581 = vmatprep.subr.mxu0 %v456
      %582 = vmatpush1.msra.mxu0 %v455
      %583 = vmatprep.subr.mxu0 %v452
      %584 = vmatpush1.msra.mxu0 %v451
      %585 = vmatprep.subr.mxu0 %v448
      %586 = vmatpush1.msra.mxu0 %v447
      %587 = vmatprep.subr.mxu0 %v444
      %588 = vmatpush1.msra.mxu0 %v443
      %589 = vmatprep.subr.mxu0 %v440
      %590 = vmatpush1.msra.mxu0 %v439
      %591 = vmatprep.subr.mxu0 %v436
      %592 = vmatpush1.msra.mxu0 %v435
      %593 = vmatprep.subr.mxu0 %v432
      %594 = vmatpush1.msra.mxu0 %v431
      %595 = vmatprep.subr.mxu0 %v428
      %596 = vmatpush1.msra.mxu0 %v427
      %597 = vmatprep.subr.mxu0 %v424
      %598 = vmatpush1.msra.mxu0 %v423
      %599 = vmatprep.subr.mxu0 %v420
      %600 = vmatpush1.msra.mxu0 %v419
      %601 = vmatprep.subr.mxu0 0.0
      %602 = vmatpush2.msra.mxu0 0.0
      %603 = vmatprep.subr.mxu0 0.0
      %604 = vmatpush2.msra.mxu0 0.0
      %605 = vmatprep.subr.mxu0 0.0
      %606 = vmatpush2.msra.mxu0 0.0
      %607 = vmatprep.subr.mxu0 0.0
      %608 = vmatpush2.msra.mxu0 0.0
      %609 = vmatprep.subr.mxu0 0.0
      %610 = vmatpush2.msra.mxu0 0.0
      %611 = vmatprep.subr.mxu0 0.0
      %612 = vmatpush2.msra.mxu0 0.0
      %613 = vmatprep.subr.mxu0 0.0
      %614 = vmatpush2.msra.mxu0 0.0
      %615 = vmatprep.subr.mxu0 0.0
      %616 = vmatpush2.msra.mxu0 0.0
      %617 = vmatprep.subr.mxu0 0.0
      %618 = vmatpush2.msra.mxu0 0.0
      %619 = vmatprep.subr.mxu0 0.0
      %620 = vmatpush2.msra.mxu0 0.0
      %621 = vmatprep.subr.mxu0 0.0
      %622 = vmatpush2.msra.mxu0 0.0
      %623 = vmatprep.subr.mxu0 0.0
      %624 = vmatpush2.msra.mxu0 0.0
      %625 = vmatprep.subr.mxu0 0.0
      %626 = vmatpush2.msra.mxu0 0.0
      %627 = vmatprep.subr.mxu0 0.0
      %628 = vmatpush2.msra.mxu0 0.0
      %629 = vmatprep.subr.mxu0 0.0
      %630 = vmatpush2.msra.mxu0 0.0
      %631 = vmatprep.subr.mxu0 0.0
      %632 = vmatpush2.msra.mxu0 0.0
      %633 = vmatprep.mubr.f32.mxu0 0.0
      %634 = vmatmul.mubr.f32.gmra.mxu0 %v489
      %v635 = vpop.f32.mrf.mxu0
      %v636 = vadd.f32 0.0, %v635
      %v637 = vpop.f32.mrf.mxu0
      %v638 = vadd.f32 0.0, %v637
      %639 = vdwg.mxu0
      %v640 = vadd.f32 %v494, %v565
      %v641 = vadd.f32 %v495, %v567
      %v642 = vadd.f32 %v496, %v636
      %v643 = vadd.f32 %v497, %v638
      %v644 = vmul.f32 %v640, 0.5
      %v645 = vtanh.pop %v644
      %v646 = vmul.f32 %v645, 0.5
      %v647 = vadd.f32 %v646, 0.5
      %v648 = vmul.f32 %v641, 0.5
      %v649 = vtanh.pop %v648
      %v650 = vmul.f32 %v649, 0.5
      %v651 = vadd.f32 %v650, 0.5
      %v652 = vtanh.pop %v642
      %v653 = vmul.f32 %v643, 0.5
      %v654 = vtanh.pop %v653
      %v655 = vmul.f32 %v654, 0.5
      %v656 = vadd.f32 %v655, 0.5
      %v657 = vmul.f32 %v651, %v490
      %v658 = vmul.f32 %v647, %v652
      %v659 = vadd.f32 %v657, %v658
      %v660 = vtanh.pop %v659
      %v661 = vmul.f32 %v656, %v660
      %s662 = smul.u32 %s484, 8
      %s663 = scalar_lea.vmem [#allocation11], %s662
      %664 = vst [vmem:[%s663] sm:$0xff] %v661
    $region38: #{tpu_custom_call.1} parent=1 // loop_footer
      %s488 = sadd.s32 1, %s484
    $region39: #{tpu_custom_call.1} parent=1 // loop_footer_branch
      %483 = sbr.rel target = $region35
    $region40: #{tpu_custom_call.1} parent=1 // loop_exit
      _
    %665 = vst [vmem:[#allocation3] sm:$0xff] %v489
    %666 = vst [vmem:[#allocation4] sm:$0xff] %v490
    // Predicated region
    $region41: #{tpu_custom_call.1} parent=1 // pred_check
      _
    $region42: #{tpu_custom_call.1} parent=1 // pred_check_branch
      %668 = sbr.rel (0) target = $region44
    $region43: #{tpu_custom_call.1} parent=1 // pred_region
      %s670 = ssub.s32 1024, 1024
      %671 = vsyncadd [#allocation7], %s670
      %s672 = sshll.u32 [#allocation11], 4
      %s673 = int_to_ptr.vmem [resolvable:$true] %s672
      %678 = dma.vmem_to_hbm [thread:$0]  %s673, 1024, %s4, [#allocation7], 128, 128, 8
    $region44: #{tpu_custom_call.1} parent=1 // pred_fallthru
      _
    // Predicated region
    $region45: #{tpu_custom_call.1} parent=1 // pred_check
      _
    $region46: #{tpu_custom_call.1} parent=1 // pred_check_branch
      %680 = sbr.rel (0) target = $region48
    $region47: #{tpu_custom_call.1} parent=1 // pred_region
      %681 = dma.done [#allocation7], 1024
    $region48: #{tpu_custom_call.1} parent=1 // pred_fallthru
      _
    %682 = vsyncpa [#allocation6], 1
    %683 = vsyncpa [#allocation9], 1
    %684 = vsyncpa [#allocation7], 1

</llo_original>
